<compile_context>
chip_gen: v5e
topology: v5e:2x2
jax: 0.10.0
libtpu: 0.0.40
codegen_flags: <defaults>
</compile_context>

<pallas_src>
import functools

import jax
import jax.numpy as jnp
from jax.experimental import pallas as pl
from jax.experimental.pallas import tpu as pltpu

_PALLAS_MIN_BYTES = 256 * 1024        # below this, XLA take+broadcast wins outright
_MIN_SPLIT_BYTES = 8 * 1024 * 1024    # above this, force >=2 grid steps (v7x megacore)


def _emotion_embed_kernel(labels_ref, table_ref, out_ref):
    # labels_ref: VMEM int32 [tb, 1]   clamped emotion labels for this batch tile
    # table_ref : VMEM [E, lane]       embedding row replicated s_rep times along
    #                                  lanes; constant index_map -> fetched once
    # out_ref   : VMEM [tb, lane]      lane-dense output block, lane = s_rep * D
    tb = out_ref.shape[0]
    num_emotions = table_ref.shape[0]

    labels = labels_ref[...]                                           # [tb, 1]
    iota = jax.lax.broadcasted_iota(jnp.int32, (tb, num_emotions), 1)  # [tb, E]
    onehot = (iota == labels).astype(table_ref.dtype)                  # exact 0/1

    # Gather-as-matmul on the MXU.  Multiplying by exact 0/1 with f32 accumulation
    # reproduces the table rows; HIGHEST precision keeps f32 tables faithful
    # through the bf16 MXU passes (bf16 tables are exact regardless).
    gathered = jnp.dot(onehot, table_ref[...],
                       preferred_element_type=jnp.float32,
                       precision=jax.lax.Precision.HIGHEST)
    out_ref[...] = gathered.astype(out_ref.dtype)


def _vmem_budget_bytes():
    """Generation-aware VMEM budget for this kernel (conservative fallback)."""
    phys = 64 * 1024 * 1024   # v7x per-TensorCore VMEM; safe lower bound
    try:
        info = pltpu.get_tpu_info()
        phys = int(getattr(info, "vmem_capacity_bytes", phys)) or phys
    except Exception:
        pass
    # Use at most half of physical VMEM, capped at 48 MiB, and raise the scoped
    # limit to this value via CompilerParams(vmem_limit_bytes=...).
    return int(min(phys // 2, 48 * 1024 * 1024))


def _sublane_packing(dtype):
    # Sub-32-bit dtypes pack along sublanes: 16 rows/tile for bf16, 32 for int8.
    return {1: 32, 2: 16}.get(jnp.dtype(dtype).itemsize, 8)


def _pick_seq_chunk(seq_len, emb_dim, num_emotions, itemsize, table_cap, block_cap):
    """Largest divisor of seq_len whose replicated row fits the VMEM caps and keeps
    the output block's last dim either a multiple of 128 or the full extent."""
    best = None
    for d in range(1, seq_len + 1):
        if seq_len % d:
            continue
        row_bytes = d * emb_dim * itemsize
        if row_bytes > block_cap or num_emotions * row_bytes > table_cap:
            continue
        if (d * emb_dim) % 128 == 0 or d == seq_len:
            best = d
    if best is None:
        # Nothing fits the caps; the full row is always tiling-legal, and the
        # raised vmem_limit_bytes absorbs the overshoot.
        best = seq_len
    return best


def _pick_batch_tile(batch, row_bytes, block_cap, packing):
    cap_rows = max(1, block_cap // row_bytes)
    # On large outputs make sure the ("parallel","parallel") grid has >=2 steps so
    # both v7x TensorCores get work; negligible extra overhead on 1-TC chips.
    if batch * row_bytes >= _MIN_SPLIT_BYTES:
        cap_rows = min(cap_rows, pl.cdiv(batch, 2))
    if cap_rows >= batch:
        return batch                          # full extent: always tiling-legal
    if cap_rows >= packing:
        return (cap_rows // packing) * packing
    return min(packing, batch)


def _run_pallas(labels2d, table_rep, *, batch, seq_len, emb_dim, dtype,
                num_emotions, tb, lane, n_bat, n_seq, vmem_limit,
                single_buffer_table):
    if single_buffer_table:
        # Constant-index resident table: no point double-buffering it.
        table_spec = pl.BlockSpec((num_emotions, lane), lambda i, j: (0, 0),
                                  pipeline_mode=pl.Buffered(1))
    else:
        table_spec = pl.BlockSpec((num_emotions, lane), lambda i, j: (0, 0))

    return pl.pallas_call(
        _emotion_embed_kernel,
        out_shape=jax.ShapeDtypeStruct((batch, seq_len * emb_dim), dtype),
        grid=(n_bat, n_seq),
        in_specs=[
            pl.BlockSpec((tb, 1), lambda i, j: (i, 0)),   # labels per batch tile
            table_spec,                                   # resident replicated table
        ],
        out_specs=pl.BlockSpec((tb, lane), lambda i, j: (i, j)),
        compiler_params=pltpu.CompilerParams(
            dimension_semantics=("parallel", "parallel"),
            vmem_limit_bytes=int(vmem_limit)),
    )(labels2d, table_rep)


def emotion_embedding_forward(emotion_labels, embedding_table, seq_len, *,
                              seq_chunk=None, batch_tile=None, force_pallas=False):
    """emotion_labels: int[B]; embedding_table: [num_emotions, D] -> [B, seq_len, D]."""
    num_emotions, emb_dim = embedding_table.shape
    batch = emotion_labels.shape[0]
    dtype = embedding_table.dtype
    itemsize = jnp.dtype(dtype).itemsize

    # Clamp labels so an out-of-range label can never select a bogus row.
    labels = jnp.clip(emotion_labels.astype(jnp.int32), 0, num_emotions - 1)

    # Tiny outputs: pallas_call launch / per-step overhead dwarfs the work, let
    # XLA fuse the gather + broadcast.
    if not force_pallas and batch * seq_len * emb_dim * itemsize < _PALLAS_MIN_BYTES:
        emb = jnp.take(embedding_table, labels, axis=0)
        return jnp.broadcast_to(emb[:, None, :], (batch, seq_len, emb_dim))

    budget = _vmem_budget_bytes()
    table_cap = budget // 8     # replicated-table cap (cheap even if double-buffered)
    block_cap = budget // 6     # per-step output block cap (leaves room for the
                                # double-buffered output + f32 matmul temp)

    s_rep = seq_chunk if seq_chunk is not None else _pick_seq_chunk(
        seq_len, emb_dim, num_emotions, itemsize, table_cap, block_cap)
    assert seq_len % s_rep == 0, "seq_chunk must divide seq_len"
    n_seq = seq_len // s_rep
    lane = s_rep * emb_dim                      # lane-dense chunk width
    row_bytes = lane * itemsize

    tb = batch_tile if batch_tile is not None else _pick_batch_tile(
        batch, row_bytes, block_cap, _sublane_packing(dtype))
    n_bat = pl.cdiv(batch, tb)

    # Embedding row e replicated s_rep times along the lane axis -> [E, lane].
    # Tiny; built once in XLA and held resident in VMEM by a constant index_map.
    table_rep = jnp.broadcast_to(
        embedding_table[:, None, :], (num_emotions, s_rep, emb_dim)
    ).reshape(num_emotions, lane)

    labels2d = labels.reshape(batch, 1)

    run = functools.partial(
        _run_pallas, batch=batch, seq_len=seq_len, emb_dim=emb_dim, dtype=dtype,
        num_emotions=num_emotions, tb=tb, lane=lane, n_bat=n_bat, n_seq=n_seq,
        vmem_limit=budget)
    try:
        out2d = run(labels2d, table_rep, single_buffer_table=True)
    except Exception:
        # Some jax builds may reject pl.Buffered(1) on a pallas_call BlockSpec;
        # the kernel is still correct (and the table tiny) when double-buffered.
        out2d = run(labels2d, table_rep, single_buffer_table=False)

    # Free (contiguous) reshape back to the module's [B, seq_len, D] layout.
    return out2d.reshape(batch, seq_len, emb_dim)


if __name__ == "__main__":
    # Small, deterministic problem sizes consistent with the module.
    num_emotions = 8
    embedding_dim = 32
    batch = 2
    seq_len = 8

    key = jax.random.PRNGKey(0)
    k_table, k_labels, k_labels2 = jax.random.split(key, 3)

    # nn.Embedding default init: N(0, 1).
    embedding_table = jax.random.normal(
        k_table, (num_emotions, embedding_dim), dtype=jnp.float32)
    emotion_labels = jax.random.randint(
        k_labels, (batch,), 0, num_emotions, dtype=jnp.int32)

    ref = jnp.broadcast_to(
        jnp.take(embedding_table, emotion_labels, axis=0)[:, None, :],
        (batch, seq_len, embedding_dim))

    # 1) Pallas path, single grid step (tb = full batch, full-row lane block).
    out = emotion_embedding_forward(emotion_labels, embedding_table, seq_len,
                                    force_pallas=True)
    out = jax.block_until_ready(out)
    assert out.shape == (batch, seq_len, embedding_dim)
    assert out.dtype == jnp.float32
    assert jnp.allclose(out, ref), "Pallas mismatch (single-block path)"

    # 2) Pallas path with a forced multi-chunk grid along the sequence axis
    #    (seq_chunk=4 -> lane width 128, 2 lane chunks).
    out2 = emotion_embedding_forward(emotion_labels, embedding_table, seq_len,
                                     seq_chunk=4, force_pallas=True)
    out2 = jax.block_until_ready(out2)
    assert jnp.allclose(out2, ref), "Pallas mismatch (seq-chunked path)"

    # 3) Pallas path with a ragged batch tile (batch=10, tile=8 -> 2 batch tiles,
    #    second tile padded) to exercise the general grid + padded-label handling.
    batch3 = 10
    labels3 = jax.random.randint(k_labels2, (batch3,), 0, num_emotions,
                                 dtype=jnp.int32)
    ref3 = jnp.broadcast_to(
        jnp.take(embedding_table, labels3, axis=0)[:, None, :],
        (batch3, seq_len, embedding_dim))
    out3 = emotion_embedding_forward(labels3, embedding_table, seq_len,
                                     batch_tile=8, force_pallas=True)
    out3 = jax.block_until_ready(out3)
    assert jnp.allclose(out3, ref3), "Pallas mismatch (ragged batch tile)"

    # 4) Small-shape fast path (XLA take + broadcast bypass).
    out4 = emotion_embedding_forward(emotion_labels, embedding_table, seq_len)
    out4 = jax.block_until_ready(out4)
    assert jnp.allclose(out4, ref), "mismatch (XLA bypass path)"

    print("KERNEL_OK")
</pallas_src>

<mosaic_0001>
module attributes {stable_mosaic.version = 11 : i64} {
  func.func @_emotion_embed_kernel(%arg0: i32, %arg1: i32, %arg2: memref<2x1xi32, #tpu.memory_space<vmem>>, %arg3: memref<8x256xf32, #tpu.memory_space<vmem>>, %arg4: memref<2x256xf32, #tpu.memory_space<vmem>>) attributes {dimension_semantics = [#tpu.dimension_semantics<parallel>, #tpu.dimension_semantics<parallel>], iteration_bounds = array<i64: 1, 1>, scalar_prefetch = 0 : i64, scratch_operands = 0 : i64, tpu.core_type = #tpu.core_type<tc>, window_params = [{transform_indices = @transform_0, window_bounds = array<i64: 2, 1>}, {pipeline_mode = #tpu.pipeline_mode<synchronous>, transform_indices = @transform_1, window_bounds = array<i64: 8, 256>}, {transform_indices = @transform_2, window_bounds = array<i64: 2, 256>}]} {
    %c0 = arith.constant 0 : index
    %c0_0 = arith.constant 0 : index
    %0 = vector.load %arg2[%c0, %c0_0] : memref<2x1xi32, #tpu.memory_space<vmem>>, vector<2x1xi32>
    %1 = tpu.iota {dimensions = array<i32: 1>} : vector<2x8xi32>
    %2 = vector.broadcast %0 : vector<2x1xi32> to vector<2x8xi32>
    %3 = arith.cmpi eq, %1, %2 : vector<2x8xi32>
    %4 = arith.extui %3 : vector<2x8xi1> to vector<2x8xi32>
    %5 = arith.sitofp %4 : vector<2x8xi32> to vector<2x8xf32>
    %c0_1 = arith.constant 0 : index
    %c0_2 = arith.constant 0 : index
    %6 = vector.load %arg3[%c0_1, %c0_2] : memref<8x256xf32, #tpu.memory_space<vmem>>, vector<8x256xf32>
    %cst = arith.constant dense<0.000000e+00> : vector<2x256xf32>
    %7 = tpu.matmul %5, %6, %cst {dimension_numbers = #tpu.dot_dimension_numbers<[1], [0], [0], [1], [0, 0, 1, 1], [], []>, precision = #tpu.contract_precision<fp32>} : vector<2x8xf32>, vector<8x256xf32>, vector<2x256xf32> -> vector<2x256xf32>
    %c0_3 = arith.constant 0 : index
    %c0_4 = arith.constant 0 : index
    %8 = vector.load %arg4[%c0_3, %c0_4] : memref<2x256xf32, #tpu.memory_space<vmem>>, vector<2x256xf32>
    tpu.vector_store %arg4[%c0_3, %c0_4], %7 {strides = array<i32>} : memref<2x256xf32, #tpu.memory_space<vmem>>, vector<2x256xf32>,
    return
  }
  func.func @transform_0(%arg0: i32, %arg1: i32) -> (i32, i32) {
    %c0_i32 = arith.constant 0 : i32
    %c0_i32_0 = arith.constant 0 : i32
    return %arg0, %c0_i32 : i32, i32
  }
  func.func @transform_1(%arg0: i32, %arg1: i32) -> (i32, i32) {
    %c0_i32 = arith.constant 0 : i32
    %c0_i32_0 = arith.constant 0 : i32
    %c0_i32_1 = arith.constant 0 : i32
    return %c0_i32, %c0_i32_0 : i32, i32
  }
  func.func @transform_2(%arg0: i32, %arg1: i32) -> (i32, i32) {
    %c0_i32 = arith.constant 0 : i32
    return %arg0, %arg1 : i32, i32
  }
}

module attributes {stable_mosaic.version = 11 : i64} {
  func.func @_emotion_embed_kernel(%arg0: i32, %arg1: i32, %arg2: memref<2x1xi32, #tpu.memory_space<vmem>>, %arg3: memref<8x256xf32, #tpu.memory_space<vmem>>, %arg4: memref<2x256xf32, #tpu.memory_space<vmem>>) attributes {dimension_semantics = [#tpu.dimension_semantics<parallel>, #tpu.dimension_semantics<parallel>], iteration_bounds = array<i64: 1, 1>, scalar_prefetch = 0 : i64, scratch_operands = 0 : i64, tpu.core_type = #tpu.core_type<tc>, window_params = [{transform_indices = @transform_0, window_bounds = array<i64: 2, 1>}, {pipeline_mode = #tpu.pipeline_mode<synchronous>, transform_indices = @transform_1, window_bounds = array<i64: 8, 256>}, {transform_indices = @transform_2, window_bounds = array<i64: 2, 256>}]} {
    %c0 = arith.constant 0 : index
    %c0_0 = arith.constant 0 : index
    %0 = vector.load %arg2[%c0, %c0_0] : memref<2x1xi32, #tpu.memory_space<vmem>>, vector<2x1xi32>
    %1 = tpu.iota {dimensions = array<i32: 1>} : vector<2x8xi32>
    %2 = vector.broadcast %0 : vector<2x1xi32> to vector<2x8xi32>
    %3 = arith.cmpi eq, %1, %2 : vector<2x8xi32>
    %4 = arith.extui %3 : vector<2x8xi1> to vector<2x8xi32>
    %5 = arith.sitofp %4 : vector<2x8xi32> to vector<2x8xf32>
    %c0_1 = arith.constant 0 : index
    %c0_2 = arith.constant 0 : index
    %6 = vector.load %arg3[%c0_1, %c0_2] : memref<8x256xf32, #tpu.memory_space<vmem>>, vector<8x256xf32>
    %cst = arith.constant dense<0.000000e+00> : vector<2x256xf32>
    %7 = tpu.matmul %5, %6, %cst {dimension_numbers = #tpu.dot_dimension_numbers<[1], [0], [0], [1], [0, 0, 1, 1], [], []>, precision = #tpu.contract_precision<fp32>} : vector<2x8xf32>, vector<8x256xf32>, vector<2x256xf32> -> vector<2x256xf32>
    %c0_3 = arith.constant 0 : index
    %c0_4 = arith.constant 0 : index
    %8 = vector.load %arg4[%c0_3, %c0_4] : memref<2x256xf32, #tpu.memory_space<vmem>>, vector<2x256xf32>
    tpu.vector_store %arg4[%c0_3, %c0_4], %7 {strides = array<i32>} : memref<2x256xf32, #tpu.memory_space<vmem>>, vector<2x256xf32>,
    return
  }
  func.func @transform_0(%arg0: i32, %arg1: i32) -> (i32, i32) {
    %c0_i32 = arith.constant 0 : i32
    %c0_i32_0 = arith.constant 0 : i32
    return %arg0, %c0_i32 : i32, i32
  }
  func.func @transform_1(%arg0: i32, %arg1: i32) -> (i32, i32) {
    %c0_i32 = arith.constant 0 : i32
    %c0_i32_0 = arith.constant 0 : i32
    %c0_i32_1 = arith.constant 0 : i32
    return %c0_i32, %c0_i32_0 : i32, i32
  }
  func.func @transform_2(%arg0: i32, %arg1: i32) -> (i32, i32) {
    %c0_i32 = arith.constant 0 : i32
    return %arg0, %arg1 : i32, i32
  }
}

</mosaic_0001>

<llo_original>
// kernel: tpu_custom_call.1
$region0: #{tpu_custom_call.1}
  #allocation0 [shape = 'u32[]', space=smem, size = 0x4, offset = 0x4, fixed_abs, tag = 'smem constant byte address 0x4 - core index']
  #allocation1 [shape = 'u32[72,128]{1,0:T(1,128)}', space=vmem, size = 0x9000, scoped, tag = 'internal scratch']
  %s0 = inlined_call_operand.vmem [shape: s32[2,1], index: 0, kind: input, shape index: {}]
  %s1 = inlined_call_operand.hbm [shape: f32[8,256], index: 1, kind: input, shape index: {}]
  %s2 = inlined_call_operand.hbm [shape: f32[2,256], index: 2, kind: output, shape index: {}]
  %s3 = sld [smem:[#allocation0]]
  $region22: #{tpu_custom_call.1} parent=0
    _
  %s5 = ssub.s32 1, %s3
  %s6 = scalar_select 0, %s5, %s3
  $region1: #{tpu_custom_call.1} parent=0
    #allocation2 [shape = 'u8[8192]{0}', space=vmem, size = 0x2000, scoped, tag = 'input window, operand 1, single buffered']
    #allocation3 [shape = 's32[1]{0}', space=sflag, size = 0x4, scoped, tag = 'scoped memory for tpu_custom_call.1']
    #allocation4 [shape = 's32[1]{0}', space=sflag, size = 0x4, scoped, tag = 'scoped memory for tpu_custom_call.1']
    #allocation5 [shape = 'u8[2048]{0}', space=vmem, size = 0x800, scoped, tag = 'output window, operand 0, single buffered']
    %7 = vsyncpa [#allocation3], 0
    %8 = vsyncpa [#allocation4], 0
    // Predicated region
    $region2: #{tpu_custom_call.1} parent=1 // pred_check
      _
    $region3: #{tpu_custom_call.1} parent=1 // pred_check_branch
      %10 = sbr.rel (0) target = $region5
    $region4: #{tpu_custom_call.1} parent=1 // pred_region
      _
    $region5: #{tpu_custom_call.1} parent=1 // pred_fallthru
      _
    // Predicated region
    $region6: #{tpu_custom_call.1} parent=1 // pred_check
      _
    $region7: #{tpu_custom_call.1} parent=1 // pred_check_branch
      %12 = sbr.rel (0) target = $region9
    $region8: #{tpu_custom_call.1} parent=1 // pred_region
      %14 = vsyncadd [#allocation3], 0
      %s16 = sshll.u32 %s1, 4
      %s17 = int_to_ptr.hbm [resolvable:$true] %s16
      %s18 = sshll.u32 [#allocation2], 4
      %s19 = int_to_ptr.vmem [resolvable:$true] %s18
      %21 = dma.hbm_to_vmem [thread:$0]  %s17, 256, %s19, [#allocation3]
    $region9: #{tpu_custom_call.1} parent=1 // pred_fallthru
      _
    // Predicated region
    $region10: #{tpu_custom_call.1} parent=1 // pred_check
      _
    $region11: #{tpu_custom_call.1} parent=1 // pred_check_branch
      %23 = sbr.rel (0) target = $region13
    $region12: #{tpu_custom_call.1} parent=1 // pred_region
      %25 = dma.done [#allocation3], 256
    $region13: #{tpu_custom_call.1} parent=1 // pred_fallthru
      _
    %v26 = vld [vmem:[%s0] sm:$0x3]
    %v27 = vlaneseq
    %v28 = vand.u32 %v27, 127
    %29 = vset.pattern.permute.xlu0 0
    %30 = vperm.xlu0 %29, %v26
    %v31 = vpop.permute.xlu0 %30
    %vm32 = vcmp.eq.s32.totalorder %v28, %v31
    %v33 = vsel %vm32, 1, 0
    %v34 = vcvt.s32.f32 %v33
    %v35 = vld [vmem:[#allocation2] sm:$0xff]
    %v36 = vld [vmem:[#allocation2 + $0x8] sm:$0xff]
    %vm37 = vcmask 64512
    %v39 = vsel %vm37, %v34, 0
    %41 = vmatpush.msra.mxu0 0.0
    %42 = vmatpush.msra.mxu0 0.0
    %43 = vmatpush.msra.mxu0 0.0
    %44 = vmatpush.msra.mxu0 0.0
    %45 = vmatpush.msra.mxu0 0.0
    %46 = vmatpush.msra.mxu0 0.0
    %47 = vmatpush.msra.mxu0 0.0
    %48 = vmatpush.msra.mxu0 0.0
    %49 = vmatpush.msra.mxu0 0.0
    %50 = vmatpush.msra.mxu0 0.0
    %51 = vmatpush.msra.mxu0 0.0
    %52 = vmatpush.msra.mxu0 0.0
    %53 = vmatpush.msra.mxu0 0.0
    %54 = vmatpush.msra.mxu0 0.0
    %55 = vmatpush.msra.mxu0 0.0
    %v56 = vand.u32 %v35, 4294901760
    %57 = vmatpush.msra.mxu0 %v56
    %v58 = vand.u32 %v39, 4294901760
    %v59 = vsub.f32 %v39, %v58
    %v60 = vand.u32 %v59, 4294901760
    %v61 = vsub.f32 %v59, %v60
    %v62 = vand.u32 %v61, 4294901760
    %63 = vmatmul.f32.gmra.mxu0 %v62
    %v64 = vpop.f32.mrf.mxu0
    %v65 = vadd.f32 0.0, %v64
    %66 = vdwg.mxu0
    %67 = vmatpush.msra.mxu0 0.0
    %68 = vmatpush.msra.mxu0 0.0
    %69 = vmatpush.msra.mxu0 0.0
    %70 = vmatpush.msra.mxu0 0.0
    %71 = vmatpush.msra.mxu0 0.0
    %72 = vmatpush.msra.mxu0 0.0
    %73 = vmatpush.msra.mxu0 0.0
    %74 = vmatpush.msra.mxu0 0.0
    %75 = vmatpush.msra.mxu0 0.0
    %76 = vmatpush.msra.mxu0 0.0
    %77 = vmatpush.msra.mxu0 0.0
    %78 = vmatpush.msra.mxu0 0.0
    %79 = vmatpush.msra.mxu0 0.0
    %80 = vmatpush.msra.mxu0 0.0
    %81 = vmatpush.msra.mxu0 0.0
    %v82 = vand.u32 %v35, 4294901760
    %v83 = vsub.f32 %v35, %v82
    %v84 = vand.u32 %v83, 4294901760
    %v85 = vsub.f32 %v83, %v84
    %v86 = vand.u32 %v85, 4294901760
    %87 = vmatpush.msra.mxu0 %v86
    %v88 = vand.u32 %v39, 4294901760
    %89 = vmatmul.f32.gmra.mxu0 %v88
    %v90 = vpop.f32.mrf.mxu0
    %v91 = vadd.f32 %v65, %v90
    %92 = vdwg.mxu0
    %93 = vmatpush.msra.mxu0 0.0
    %94 = vmatpush.msra.mxu0 0.0
    %95 = vmatpush.msra.mxu0 0.0
    %96 = vmatpush.msra.mxu0 0.0
    %97 = vmatpush.msra.mxu0 0.0
    %98 = vmatpush.msra.mxu0 0.0
    %99 = vmatpush.msra.mxu0 0.0
    %100 = vmatpush.msra.mxu0 0.0
    %101 = vmatpush.msra.mxu0 0.0
    %102 = vmatpush.msra.mxu0 0.0
    %103 = vmatpush.msra.mxu0 0.0
    %104 = vmatpush.msra.mxu0 0.0
    %105 = vmatpush.msra.mxu0 0.0
    %106 = vmatpush.msra.mxu0 0.0
    %107 = vmatpush.msra.mxu0 0.0
    %v108 = vand.u32 %v35, 4294901760
    %v109 = vsub.f32 %v35, %v108
    %110 = vmatpush.msra.mxu0 %v109
    %v111 = vand.u32 %v39, 4294901760
    %v112 = vsub.f32 %v39, %v111
    %113 = vmatmul.f32.gmra.mxu0 %v112
    %v114 = vpop.f32.mrf.mxu0
    %v115 = vadd.f32 %v91, %v114
    %116 = vdwg.mxu0
    %117 = vmatpush.msra.mxu0 0.0
    %118 = vmatpush.msra.mxu0 0.0
    %119 = vmatpush.msra.mxu0 0.0
    %120 = vmatpush.msra.mxu0 0.0
    %121 = vmatpush.msra.mxu0 0.0
    %122 = vmatpush.msra.mxu0 0.0
    %123 = vmatpush.msra.mxu0 0.0
    %124 = vmatpush.msra.mxu0 0.0
    %125 = vmatpush.msra.mxu0 0.0
    %126 = vmatpush.msra.mxu0 0.0
    %127 = vmatpush.msra.mxu0 0.0
    %128 = vmatpush.msra.mxu0 0.0
    %129 = vmatpush.msra.mxu0 0.0
    %130 = vmatpush.msra.mxu0 0.0
    %131 = vmatpush.msra.mxu0 0.0
    %v132 = vand.u32 %v35, 4294901760
    %133 = vmatpush.msra.mxu0 %v132
    %v134 = vand.u32 %v39, 4294901760
    %v135 = vsub.f32 %v39, %v134
    %v136 = vand.u32 %v135, 4294901760
    %137 = vmatmul.f32.gmra.mxu0 %v136
    %v138 = vpop.f32.mrf.mxu0
    %v139 = vadd.f32 %v115, %v138
    %140 = vdwg.mxu0
    %141 = vmatpush.msra.mxu0 0.0
    %142 = vmatpush.msra.mxu0 0.0
    %143 = vmatpush.msra.mxu0 0.0
    %144 = vmatpush.msra.mxu0 0.0
    %145 = vmatpush.msra.mxu0 0.0
    %146 = vmatpush.msra.mxu0 0.0
    %147 = vmatpush.msra.mxu0 0.0
    %148 = vmatpush.msra.mxu0 0.0
    %149 = vmatpush.msra.mxu0 0.0
    %150 = vmatpush.msra.mxu0 0.0
    %151 = vmatpush.msra.mxu0 0.0
    %152 = vmatpush.msra.mxu0 0.0
    %153 = vmatpush.msra.mxu0 0.0
    %154 = vmatpush.msra.mxu0 0.0
    %155 = vmatpush.msra.mxu0 0.0
    %v156 = vand.u32 %v35, 4294901760
    %v157 = vsub.f32 %v35, %v156
    %v158 = vand.u32 %v157, 4294901760
    %159 = vmatpush.msra.mxu0 %v158
    %v160 = vand.u32 %v39, 4294901760
    %161 = vmatmul.f32.gmra.mxu0 %v160
    %v162 = vpop.f32.mrf.mxu0
    %v163 = vadd.f32 %v139, %v162
    %164 = vdwg.mxu0
    %165 = vmatpush.msra.mxu0 0.0
    %166 = vmatpush.msra.mxu0 0.0
    %167 = vmatpush.msra.mxu0 0.0
    %168 = vmatpush.msra.mxu0 0.0
    %169 = vmatpush.msra.mxu0 0.0
    %170 = vmatpush.msra.mxu0 0.0
    %171 = vmatpush.msra.mxu0 0.0
    %172 = vmatpush.msra.mxu0 0.0
    %173 = vmatpush.msra.mxu0 0.0
    %174 = vmatpush.msra.mxu0 0.0
    %175 = vmatpush.msra.mxu0 0.0
    %176 = vmatpush.msra.mxu0 0.0
    %177 = vmatpush.msra.mxu0 0.0
    %178 = vmatpush.msra.mxu0 0.0
    %179 = vmatpush.msra.mxu0 0.0
    %v180 = vand.u32 %v35, 4294901760
    %181 = vmatpush.msra.mxu0 %v180
    %v182 = vand.u32 %v39, 4294901760
    %183 = vmatmul.f32.gmra.mxu0 %v182
    %v184 = vpop.f32.mrf.mxu0
    %v185 = vadd.f32 %v163, %v184
    %186 = vdwg.mxu0
    %187 = vmatpush.msra.mxu0 0.0
    %188 = vmatpush.msra.mxu0 0.0
    %189 = vmatpush.msra.mxu0 0.0
    %190 = vmatpush.msra.mxu0 0.0
    %191 = vmatpush.msra.mxu0 0.0
    %192 = vmatpush.msra.mxu0 0.0
    %193 = vmatpush.msra.mxu0 0.0
    %194 = vmatpush.msra.mxu0 0.0
    %195 = vmatpush.msra.mxu0 0.0
    %196 = vmatpush.msra.mxu0 0.0
    %197 = vmatpush.msra.mxu0 0.0
    %198 = vmatpush.msra.mxu0 0.0
    %199 = vmatpush.msra.mxu0 0.0
    %200 = vmatpush.msra.mxu0 0.0
    %201 = vmatpush.msra.mxu0 0.0
    %v202 = vand.u32 %v36, 4294901760
    %203 = vmatpush.msra.mxu0 %v202
    %v204 = vand.u32 %v39, 4294901760
    %v205 = vsub.f32 %v39, %v204
    %v206 = vand.u32 %v205, 4294901760
    %v207 = vsub.f32 %v205, %v206
    %v208 = vand.u32 %v207, 4294901760
    %209 = vmatmul.f32.gmra.mxu0 %v208
    %v210 = vpop.f32.mrf.mxu0
    %v211 = vadd.f32 0.0, %v210
    %212 = vdwg.mxu0
    %213 = vmatpush.msra.mxu0 0.0
    %214 = vmatpush.msra.mxu0 0.0
    %215 = vmatpush.msra.mxu0 0.0
    %216 = vmatpush.msra.mxu0 0.0
    %217 = vmatpush.msra.mxu0 0.0
    %218 = vmatpush.msra.mxu0 0.0
    %219 = vmatpush.msra.mxu0 0.0
    %220 = vmatpush.msra.mxu0 0.0
    %221 = vmatpush.msra.mxu0 0.0
    %222 = vmatpush.msra.mxu0 0.0
    %223 = vmatpush.msra.mxu0 0.0
    %224 = vmatpush.msra.mxu0 0.0
    %225 = vmatpush.msra.mxu0 0.0
    %226 = vmatpush.msra.mxu0 0.0
    %227 = vmatpush.msra.mxu0 0.0
    %v228 = vand.u32 %v36, 4294901760
    %v229 = vsub.f32 %v36, %v228
    %v230 = vand.u32 %v229, 4294901760
    %v231 = vsub.f32 %v229, %v230
    %v232 = vand.u32 %v231, 4294901760
    %233 = vmatpush.msra.mxu0 %v232
    %v234 = vand.u32 %v39, 4294901760
    %235 = vmatmul.f32.gmra.mxu0 %v234
    %v236 = vpop.f32.mrf.mxu0
    %v237 = vadd.f32 %v211, %v236
    %238 = vdwg.mxu0
    %239 = vmatpush.msra.mxu0 0.0
    %240 = vmatpush.msra.mxu0 0.0
    %241 = vmatpush.msra.mxu0 0.0
    %242 = vmatpush.msra.mxu0 0.0
    %243 = vmatpush.msra.mxu0 0.0
    %244 = vmatpush.msra.mxu0 0.0
    %245 = vmatpush.msra.mxu0 0.0
    %246 = vmatpush.msra.mxu0 0.0
    %247 = vmatpush.msra.mxu0 0.0
    %248 = vmatpush.msra.mxu0 0.0
    %249 = vmatpush.msra.mxu0 0.0
    %250 = vmatpush.msra.mxu0 0.0
    %251 = vmatpush.msra.mxu0 0.0
    %252 = vmatpush.msra.mxu0 0.0
    %253 = vmatpush.msra.mxu0 0.0
    %v254 = vand.u32 %v36, 4294901760
    %v255 = vsub.f32 %v36, %v254
    %256 = vmatpush.msra.mxu0 %v255
    %v257 = vand.u32 %v39, 4294901760
    %v258 = vsub.f32 %v39, %v257
    %259 = vmatmul.f32.gmra.mxu0 %v258
    %v260 = vpop.f32.mrf.mxu0
    %v261 = vadd.f32 %v237, %v260
    %262 = vdwg.mxu0
    %263 = vmatpush.msra.mxu0 0.0
    %264 = vmatpush.msra.mxu0 0.0
    %265 = vmatpush.msra.mxu0 0.0
    %266 = vmatpush.msra.mxu0 0.0
    %267 = vmatpush.msra.mxu0 0.0
    %268 = vmatpush.msra.mxu0 0.0
    %269 = vmatpush.msra.mxu0 0.0
    %270 = vmatpush.msra.mxu0 0.0
    %271 = vmatpush.msra.mxu0 0.0
    %272 = vmatpush.msra.mxu0 0.0
    %273 = vmatpush.msra.mxu0 0.0
    %274 = vmatpush.msra.mxu0 0.0
    %275 = vmatpush.msra.mxu0 0.0
    %276 = vmatpush.msra.mxu0 0.0
    %277 = vmatpush.msra.mxu0 0.0
    %v278 = vand.u32 %v36, 4294901760
    %279 = vmatpush.msra.mxu0 %v278
    %v280 = vand.u32 %v39, 4294901760
    %v281 = vsub.f32 %v39, %v280
    %v282 = vand.u32 %v281, 4294901760
    %283 = vmatmul.f32.gmra.mxu0 %v282
    %v284 = vpop.f32.mrf.mxu0
    %v285 = vadd.f32 %v261, %v284
    %286 = vdwg.mxu0
    %287 = vmatpush.msra.mxu0 0.0
    %288 = vmatpush.msra.mxu0 0.0
    %289 = vmatpush.msra.mxu0 0.0
    %290 = vmatpush.msra.mxu0 0.0
    %291 = vmatpush.msra.mxu0 0.0
    %292 = vmatpush.msra.mxu0 0.0
    %293 = vmatpush.msra.mxu0 0.0
    %294 = vmatpush.msra.mxu0 0.0
    %295 = vmatpush.msra.mxu0 0.0
    %296 = vmatpush.msra.mxu0 0.0
    %297 = vmatpush.msra.mxu0 0.0
    %298 = vmatpush.msra.mxu0 0.0
    %299 = vmatpush.msra.mxu0 0.0
    %300 = vmatpush.msra.mxu0 0.0
    %301 = vmatpush.msra.mxu0 0.0
    %v302 = vand.u32 %v36, 4294901760
    %v303 = vsub.f32 %v36, %v302
    %v304 = vand.u32 %v303, 4294901760
    %305 = vmatpush.msra.mxu0 %v304
    %v306 = vand.u32 %v39, 4294901760
    %307 = vmatmul.f32.gmra.mxu0 %v306
    %v308 = vpop.f32.mrf.mxu0
    %v309 = vadd.f32 %v285, %v308
    %310 = vdwg.mxu0
    %311 = vmatpush.msra.mxu0 0.0
    %312 = vmatpush.msra.mxu0 0.0
    %313 = vmatpush.msra.mxu0 0.0
    %314 = vmatpush.msra.mxu0 0.0
    %315 = vmatpush.msra.mxu0 0.0
    %316 = vmatpush.msra.mxu0 0.0
    %317 = vmatpush.msra.mxu0 0.0
    %318 = vmatpush.msra.mxu0 0.0
    %319 = vmatpush.msra.mxu0 0.0
    %320 = vmatpush.msra.mxu0 0.0
    %321 = vmatpush.msra.mxu0 0.0
    %322 = vmatpush.msra.mxu0 0.0
    %323 = vmatpush.msra.mxu0 0.0
    %324 = vmatpush.msra.mxu0 0.0
    %325 = vmatpush.msra.mxu0 0.0
    %v326 = vand.u32 %v36, 4294901760
    %327 = vmatpush.msra.mxu0 %v326
    %v328 = vand.u32 %v39, 4294901760
    %329 = vmatmul.f32.gmra.mxu0 %v328
    %v330 = vpop.f32.mrf.mxu0
    %v331 = vadd.f32 %v309, %v330
    %332 = vdwg.mxu0
    %v335 = vrot.slane %v331, 6
    %vm336 = vcmask 1041408
    %v337 = vsel %vm336, %v185, %v335
    %339 = vst [vmem:[#allocation5] sm:$0xf] %v337
    // Predicated region
    $region14: #{tpu_custom_call.1} parent=1 // pred_check
      _
    $region15: #{tpu_custom_call.1} parent=1 // pred_check_branch
      %341 = sbr.rel (0) target = $region17
    $region16: #{tpu_custom_call.1} parent=1 // pred_region
      %343 = vsyncadd [#allocation4], 0
      %s345 = sshll.u32 [#allocation5], 4
      %s346 = int_to_ptr.vmem [resolvable:$true] %s345
      %s347 = sshll.u32 %s2, 4
      %s348 = int_to_ptr.hbm [resolvable:$true] %s347
      %350 = dma.vmem_to_hbm [thread:$0]  %s346, 64, %s348, [#allocation4]
    $region17: #{tpu_custom_call.1} parent=1 // pred_fallthru
      _
    // Predicated region
    $region18: #{tpu_custom_call.1} parent=1 // pred_check
      _
    $region19: #{tpu_custom_call.1} parent=1 // pred_check_branch
      %352 = sbr.rel (0) target = $region21
    $region20: #{tpu_custom_call.1} parent=1 // pred_region
      %354 = dma.done [#allocation4], 64
    $region21: #{tpu_custom_call.1} parent=1 // pred_fallthru
      _
    %355 = vsyncpa [#allocation3], 1
    %356 = vsyncpa [#allocation4], 1

// kernel: tpu_custom_call.1
$region0: #{tpu_custom_call.1}
  #allocation0 [shape = 'u32[]', space=smem, size = 0x4, offset = 0x4, fixed_abs, tag = 'smem constant byte address 0x4 - core index']
  #allocation1 [shape = 'u32[72,128]{1,0:T(1,128)}', space=vmem, size = 0x9000, scoped, tag = 'internal scratch']
  %s0 = inlined_call_operand.vmem [shape: s32[2,1], index: 0, kind: input, shape index: {}]
  %s1 = inlined_call_operand.hbm [shape: f32[8,256], index: 1, kind: input, shape index: {}]
  %s2 = inlined_call_operand.hbm [shape: f32[2,256], index: 2, kind: output, shape index: {}]
  %s3 = sld [smem:[#allocation0]]
  $region22: #{tpu_custom_call.1} parent=0
    _
  %s5 = ssub.s32 1, %s3
  %s6 = scalar_select 0, %s5, %s3
  $region1: #{tpu_custom_call.1} parent=0
    #allocation2 [shape = 'u8[8192]{0}', space=vmem, size = 0x2000, scoped, tag = 'input window, operand 1, single buffered']
    #allocation3 [shape = 's32[1]{0}', space=sflag, size = 0x4, scoped, tag = 'scoped memory for tpu_custom_call.1']
    #allocation4 [shape = 's32[1]{0}', space=sflag, size = 0x4, scoped, tag = 'scoped memory for tpu_custom_call.1']
    #allocation5 [shape = 'u8[2048]{0}', space=vmem, size = 0x800, scoped, tag = 'output window, operand 0, single buffered']
    %7 = vsyncpa [#allocation3], 0
    %8 = vsyncpa [#allocation4], 0
    // Predicated region
    $region2: #{tpu_custom_call.1} parent=1 // pred_check
      _
    $region3: #{tpu_custom_call.1} parent=1 // pred_check_branch
      %10 = sbr.rel (0) target = $region5
    $region4: #{tpu_custom_call.1} parent=1 // pred_region
      _
    $region5: #{tpu_custom_call.1} parent=1 // pred_fallthru
      _
    // Predicated region
    $region6: #{tpu_custom_call.1} parent=1 // pred_check
      _
    $region7: #{tpu_custom_call.1} parent=1 // pred_check_branch
      %12 = sbr.rel (0) target = $region9
    $region8: #{tpu_custom_call.1} parent=1 // pred_region
      %14 = vsyncadd [#allocation3], 0
      %s16 = sshll.u32 %s1, 4
      %s17 = int_to_ptr.hbm [resolvable:$true] %s16
      %s18 = sshll.u32 [#allocation2], 4
      %s19 = int_to_ptr.vmem [resolvable:$true] %s18
      %21 = dma.hbm_to_vmem [thread:$0]  %s17, 256, %s19, [#allocation3]
    $region9: #{tpu_custom_call.1} parent=1 // pred_fallthru
      _
    // Predicated region
    $region10: #{tpu_custom_call.1} parent=1 // pred_check
      _
    $region11: #{tpu_custom_call.1} parent=1 // pred_check_branch
      %23 = sbr.rel (0) target = $region13
    $region12: #{tpu_custom_call.1} parent=1 // pred_region
      %25 = dma.done [#allocation3], 256
    $region13: #{tpu_custom_call.1} parent=1 // pred_fallthru
      _
    %v26 = vld [vmem:[%s0] sm:$0x3]
    %v27 = vlaneseq
    %v28 = vand.u32 %v27, 127
    %29 = vset.pattern.permute.xlu0 0
    %30 = vperm.xlu0 %29, %v26
    %v31 = vpop.permute.xlu0 %30
    %vm32 = vcmp.eq.s32.totalorder %v28, %v31
    %v33 = vsel %vm32, 1, 0
    %v34 = vcvt.s32.f32 %v33
    %v35 = vld [vmem:[#allocation2] sm:$0xff]
    %v36 = vld [vmem:[#allocation2 + $0x8] sm:$0xff]
    %vm37 = vcmask 64512
    %v39 = vsel %vm37, %v34, 0
    %41 = vmatpush.msra.mxu0 0.0
    %42 = vmatpush.msra.mxu0 0.0
    %43 = vmatpush.msra.mxu0 0.0
    %44 = vmatpush.msra.mxu0 0.0
    %45 = vmatpush.msra.mxu0 0.0
    %46 = vmatpush.msra.mxu0 0.0
    %47 = vmatpush.msra.mxu0 0.0
    %48 = vmatpush.msra.mxu0 0.0
    %49 = vmatpush.msra.mxu0 0.0
    %50 = vmatpush.msra.mxu0 0.0
    %51 = vmatpush.msra.mxu0 0.0
    %52 = vmatpush.msra.mxu0 0.0
    %53 = vmatpush.msra.mxu0 0.0
    %54 = vmatpush.msra.mxu0 0.0
    %55 = vmatpush.msra.mxu0 0.0
    %v56 = vand.u32 %v35, 4294901760
    %57 = vmatpush.msra.mxu0 %v56
    %v58 = vand.u32 %v39, 4294901760
    %v59 = vsub.f32 %v39, %v58
    %v60 = vand.u32 %v59, 4294901760
    %v61 = vsub.f32 %v59, %v60
    %v62 = vand.u32 %v61, 4294901760
    %63 = vmatmul.f32.gmra.mxu0 %v62
    %v64 = vpop.f32.mrf.mxu0
    %v65 = vadd.f32 0.0, %v64
    %66 = vdwg.mxu0
    %67 = vmatpush.msra.mxu0 0.0
    %68 = vmatpush.msra.mxu0 0.0
    %69 = vmatpush.msra.mxu0 0.0
    %70 = vmatpush.msra.mxu0 0.0
    %71 = vmatpush.msra.mxu0 0.0
    %72 = vmatpush.msra.mxu0 0.0
    %73 = vmatpush.msra.mxu0 0.0
    %74 = vmatpush.msra.mxu0 0.0
    %75 = vmatpush.msra.mxu0 0.0
    %76 = vmatpush.msra.mxu0 0.0
    %77 = vmatpush.msra.mxu0 0.0
    %78 = vmatpush.msra.mxu0 0.0
    %79 = vmatpush.msra.mxu0 0.0
    %80 = vmatpush.msra.mxu0 0.0
    %81 = vmatpush.msra.mxu0 0.0
    %v82 = vand.u32 %v35, 4294901760
    %v83 = vsub.f32 %v35, %v82
    %v84 = vand.u32 %v83, 4294901760
    %v85 = vsub.f32 %v83, %v84
    %v86 = vand.u32 %v85, 4294901760
    %87 = vmatpush.msra.mxu0 %v86
    %v88 = vand.u32 %v39, 4294901760
    %89 = vmatmul.f32.gmra.mxu0 %v88
    %v90 = vpop.f32.mrf.mxu0
    %v91 = vadd.f32 %v65, %v90
    %92 = vdwg.mxu0
    %93 = vmatpush.msra.mxu0 0.0
    %94 = vmatpush.msra.mxu0 0.0
    %95 = vmatpush.msra.mxu0 0.0
    %96 = vmatpush.msra.mxu0 0.0
    %97 = vmatpush.msra.mxu0 0.0
    %98 = vmatpush.msra.mxu0 0.0
    %99 = vmatpush.msra.mxu0 0.0
    %100 = vmatpush.msra.mxu0 0.0
    %101 = vmatpush.msra.mxu0 0.0
    %102 = vmatpush.msra.mxu0 0.0
    %103 = vmatpush.msra.mxu0 0.0
    %104 = vmatpush.msra.mxu0 0.0
    %105 = vmatpush.msra.mxu0 0.0
    %106 = vmatpush.msra.mxu0 0.0
    %107 = vmatpush.msra.mxu0 0.0
    %v108 = vand.u32 %v35, 4294901760
    %v109 = vsub.f32 %v35, %v108
    %110 = vmatpush.msra.mxu0 %v109
    %v111 = vand.u32 %v39, 4294901760
    %v112 = vsub.f32 %v39, %v111
    %113 = vmatmul.f32.gmra.mxu0 %v112
    %v114 = vpop.f32.mrf.mxu0
    %v115 = vadd.f32 %v91, %v114
    %116 = vdwg.mxu0
    %117 = vmatpush.msra.mxu0 0.0
    %118 = vmatpush.msra.mxu0 0.0
    %119 = vmatpush.msra.mxu0 0.0
    %120 = vmatpush.msra.mxu0 0.0
    %121 = vmatpush.msra.mxu0 0.0
    %122 = vmatpush.msra.mxu0 0.0
    %123 = vmatpush.msra.mxu0 0.0
    %124 = vmatpush.msra.mxu0 0.0
    %125 = vmatpush.msra.mxu0 0.0
    %126 = vmatpush.msra.mxu0 0.0
    %127 = vmatpush.msra.mxu0 0.0
    %128 = vmatpush.msra.mxu0 0.0
    %129 = vmatpush.msra.mxu0 0.0
    %130 = vmatpush.msra.mxu0 0.0
    %131 = vmatpush.msra.mxu0 0.0
    %v132 = vand.u32 %v35, 4294901760
    %133 = vmatpush.msra.mxu0 %v132
    %v134 = vand.u32 %v39, 4294901760
    %v135 = vsub.f32 %v39, %v134
    %v136 = vand.u32 %v135, 4294901760
    %137 = vmatmul.f32.gmra.mxu0 %v136
    %v138 = vpop.f32.mrf.mxu0
    %v139 = vadd.f32 %v115, %v138
    %140 = vdwg.mxu0
    %141 = vmatpush.msra.mxu0 0.0
    %142 = vmatpush.msra.mxu0 0.0
    %143 = vmatpush.msra.mxu0 0.0
    %144 = vmatpush.msra.mxu0 0.0
    %145 = vmatpush.msra.mxu0 0.0
    %146 = vmatpush.msra.mxu0 0.0
    %147 = vmatpush.msra.mxu0 0.0
    %148 = vmatpush.msra.mxu0 0.0
    %149 = vmatpush.msra.mxu0 0.0
    %150 = vmatpush.msra.mxu0 0.0
    %151 = vmatpush.msra.mxu0 0.0
    %152 = vmatpush.msra.mxu0 0.0
    %153 = vmatpush.msra.mxu0 0.0
    %154 = vmatpush.msra.mxu0 0.0
    %155 = vmatpush.msra.mxu0 0.0
    %v156 = vand.u32 %v35, 4294901760
    %v157 = vsub.f32 %v35, %v156
    %v158 = vand.u32 %v157, 4294901760
    %159 = vmatpush.msra.mxu0 %v158
    %v160 = vand.u32 %v39, 4294901760
    %161 = vmatmul.f32.gmra.mxu0 %v160
    %v162 = vpop.f32.mrf.mxu0
    %v163 = vadd.f32 %v139, %v162
    %164 = vdwg.mxu0
    %165 = vmatpush.msra.mxu0 0.0
    %166 = vmatpush.msra.mxu0 0.0
    %167 = vmatpush.msra.mxu0 0.0
    %168 = vmatpush.msra.mxu0 0.0
    %169 = vmatpush.msra.mxu0 0.0
    %170 = vmatpush.msra.mxu0 0.0
    %171 = vmatpush.msra.mxu0 0.0
    %172 = vmatpush.msra.mxu0 0.0
    %173 = vmatpush.msra.mxu0 0.0
    %174 = vmatpush.msra.mxu0 0.0
    %175 = vmatpush.msra.mxu0 0.0
    %176 = vmatpush.msra.mxu0 0.0
    %177 = vmatpush.msra.mxu0 0.0
    %178 = vmatpush.msra.mxu0 0.0
    %179 = vmatpush.msra.mxu0 0.0
    %v180 = vand.u32 %v35, 4294901760
    %181 = vmatpush.msra.mxu0 %v180
    %v182 = vand.u32 %v39, 4294901760
    %183 = vmatmul.f32.gmra.mxu0 %v182
    %v184 = vpop.f32.mrf.mxu0
    %v185 = vadd.f32 %v163, %v184
    %186 = vdwg.mxu0
    %187 = vmatpush.msra.mxu0 0.0
    %188 = vmatpush.msra.mxu0 0.0
    %189 = vmatpush.msra.mxu0 0.0
    %190 = vmatpush.msra.mxu0 0.0
    %191 = vmatpush.msra.mxu0 0.0
    %192 = vmatpush.msra.mxu0 0.0
    %193 = vmatpush.msra.mxu0 0.0
    %194 = vmatpush.msra.mxu0 0.0
    %195 = vmatpush.msra.mxu0 0.0
    %196 = vmatpush.msra.mxu0 0.0
    %197 = vmatpush.msra.mxu0 0.0
    %198 = vmatpush.msra.mxu0 0.0
    %199 = vmatpush.msra.mxu0 0.0
    %200 = vmatpush.msra.mxu0 0.0
    %201 = vmatpush.msra.mxu0 0.0
    %v202 = vand.u32 %v36, 4294901760
    %203 = vmatpush.msra.mxu0 %v202
    %v204 = vand.u32 %v39, 4294901760
    %v205 = vsub.f32 %v39, %v204
    %v206 = vand.u32 %v205, 4294901760
    %v207 = vsub.f32 %v205, %v206
    %v208 = vand.u32 %v207, 4294901760
    %209 = vmatmul.f32.gmra.mxu0 %v208
    %v210 = vpop.f32.mrf.mxu0
    %v211 = vadd.f32 0.0, %v210
    %212 = vdwg.mxu0
    %213 = vmatpush.msra.mxu0 0.0
    %214 = vmatpush.msra.mxu0 0.0
    %215 = vmatpush.msra.mxu0 0.0
    %216 = vmatpush.msra.mxu0 0.0
    %217 = vmatpush.msra.mxu0 0.0
    %218 = vmatpush.msra.mxu0 0.0
    %219 = vmatpush.msra.mxu0 0.0
    %220 = vmatpush.msra.mxu0 0.0
    %221 = vmatpush.msra.mxu0 0.0
    %222 = vmatpush.msra.mxu0 0.0
    %223 = vmatpush.msra.mxu0 0.0
    %224 = vmatpush.msra.mxu0 0.0
    %225 = vmatpush.msra.mxu0 0.0
    %226 = vmatpush.msra.mxu0 0.0
    %227 = vmatpush.msra.mxu0 0.0
    %v228 = vand.u32 %v36, 4294901760
    %v229 = vsub.f32 %v36, %v228
    %v230 = vand.u32 %v229, 4294901760
    %v231 = vsub.f32 %v229, %v230
    %v232 = vand.u32 %v231, 4294901760
    %233 = vmatpush.msra.mxu0 %v232
    %v234 = vand.u32 %v39, 4294901760
    %235 = vmatmul.f32.gmra.mxu0 %v234
    %v236 = vpop.f32.mrf.mxu0
    %v237 = vadd.f32 %v211, %v236
    %238 = vdwg.mxu0
    %239 = vmatpush.msra.mxu0 0.0
    %240 = vmatpush.msra.mxu0 0.0
    %241 = vmatpush.msra.mxu0 0.0
    %242 = vmatpush.msra.mxu0 0.0
    %243 = vmatpush.msra.mxu0 0.0
    %244 = vmatpush.msra.mxu0 0.0
    %245 = vmatpush.msra.mxu0 0.0
    %246 = vmatpush.msra.mxu0 0.0
    %247 = vmatpush.msra.mxu0 0.0
    %248 = vmatpush.msra.mxu0 0.0
    %249 = vmatpush.msra.mxu0 0.0
    %250 = vmatpush.msra.mxu0 0.0
    %251 = vmatpush.msra.mxu0 0.0
    %252 = vmatpush.msra.mxu0 0.0
    %253 = vmatpush.msra.mxu0 0.0
    %v254 = vand.u32 %v36, 4294901760
    %v255 = vsub.f32 %v36, %v254
    %256 = vmatpush.msra.mxu0 %v255
    %v257 = vand.u32 %v39, 4294901760
    %v258 = vsub.f32 %v39, %v257
    %259 = vmatmul.f32.gmra.mxu0 %v258
    %v260 = vpop.f32.mrf.mxu0
    %v261 = vadd.f32 %v237, %v260
    %262 = vdwg.mxu0
    %263 = vmatpush.msra.mxu0 0.0
    %264 = vmatpush.msra.mxu0 0.0
    %265 = vmatpush.msra.mxu0 0.0
    %266 = vmatpush.msra.mxu0 0.0
    %267 = vmatpush.msra.mxu0 0.0
    %268 = vmatpush.msra.mxu0 0.0
    %269 = vmatpush.msra.mxu0 0.0
    %270 = vmatpush.msra.mxu0 0.0
    %271 = vmatpush.msra.mxu0 0.0
    %272 = vmatpush.msra.mxu0 0.0
    %273 = vmatpush.msra.mxu0 0.0
    %274 = vmatpush.msra.mxu0 0.0
    %275 = vmatpush.msra.mxu0 0.0
    %276 = vmatpush.msra.mxu0 0.0
    %277 = vmatpush.msra.mxu0 0.0
    %v278 = vand.u32 %v36, 4294901760
    %279 = vmatpush.msra.mxu0 %v278
    %v280 = vand.u32 %v39, 4294901760
    %v281 = vsub.f32 %v39, %v280
    %v282 = vand.u32 %v281, 4294901760
    %283 = vmatmul.f32.gmra.mxu0 %v282
    %v284 = vpop.f32.mrf.mxu0
    %v285 = vadd.f32 %v261, %v284
    %286 = vdwg.mxu0
    %287 = vmatpush.msra.mxu0 0.0
    %288 = vmatpush.msra.mxu0 0.0
    %289 = vmatpush.msra.mxu0 0.0
    %290 = vmatpush.msra.mxu0 0.0
    %291 = vmatpush.msra.mxu0 0.0
    %292 = vmatpush.msra.mxu0 0.0
    %293 = vmatpush.msra.mxu0 0.0
    %294 = vmatpush.msra.mxu0 0.0
    %295 = vmatpush.msra.mxu0 0.0
    %296 = vmatpush.msra.mxu0 0.0
    %297 = vmatpush.msra.mxu0 0.0
    %298 = vmatpush.msra.mxu0 0.0
    %299 = vmatpush.msra.mxu0 0.0
    %300 = vmatpush.msra.mxu0 0.0
    %301 = vmatpush.msra.mxu0 0.0
    %v302 = vand.u32 %v36, 4294901760
    %v303 = vsub.f32 %v36, %v302
    %v304 = vand.u32 %v303, 4294901760
    %305 = vmatpush.msra.mxu0 %v304
    %v306 = vand.u32 %v39, 4294901760
    %307 = vmatmul.f32.gmra.mxu0 %v306
    %v308 = vpop.f32.mrf.mxu0
    %v309 = vadd.f32 %v285, %v308
    %310 = vdwg.mxu0
    %311 = vmatpush.msra.mxu0 0.0
    %312 = vmatpush.msra.mxu0 0.0
    %313 = vmatpush.msra.mxu0 0.0
    %314 = vmatpush.msra.mxu0 0.0
    %315 = vmatpush.msra.mxu0 0.0
    %316 = vmatpush.msra.mxu0 0.0
    %317 = vmatpush.msra.mxu0 0.0
    %318 = vmatpush.msra.mxu0 0.0
    %319 = vmatpush.msra.mxu0 0.0
    %320 = vmatpush.msra.mxu0 0.0
    %321 = vmatpush.msra.mxu0 0.0
    %322 = vmatpush.msra.mxu0 0.0
    %323 = vmatpush.msra.mxu0 0.0
    %324 = vmatpush.msra.mxu0 0.0
    %325 = vmatpush.msra.mxu0 0.0
    %v326 = vand.u32 %v36, 4294901760
    %327 = vmatpush.msra.mxu0 %v326
    %v328 = vand.u32 %v39, 4294901760
    %329 = vmatmul.f32.gmra.mxu0 %v328
    %v330 = vpop.f32.mrf.mxu0
    %v331 = vadd.f32 %v309, %v330
    %332 = vdwg.mxu0
    %v335 = vrot.slane %v331, 6
    %vm336 = vcmask 1041408
    %v337 = vsel %vm336, %v185, %v335
    %339 = vst [vmem:[#allocation5] sm:$0xf] %v337
    // Predicated region
    $region14: #{tpu_custom_call.1} parent=1 // pred_check
      _
    $region15: #{tpu_custom_call.1} parent=1 // pred_check_branch
      %341 = sbr.rel (0) target = $region17
    $region16: #{tpu_custom_call.1} parent=1 // pred_region
      %343 = vsyncadd [#allocation4], 0
      %s345 = sshll.u32 [#allocation5], 4
      %s346 = int_to_ptr.vmem [resolvable:$true] %s345
      %s347 = sshll.u32 %s2, 4
      %s348 = int_to_ptr.hbm [resolvable:$true] %s347
      %350 = dma.vmem_to_hbm [thread:$0]  %s346, 64, %s348, [#allocation4]
    $region17: #{tpu_custom_call.1} parent=1 // pred_fallthru
      _
    // Predicated region
    $region18: #{tpu_custom_call.1} parent=1 // pred_check
      _
    $region19: #{tpu_custom_call.1} parent=1 // pred_check_branch
      %352 = sbr.rel (0) target = $region21
    $region20: #{tpu_custom_call.1} parent=1 // pred_region
      %354 = dma.done [#allocation4], 64
    $region21: #{tpu_custom_call.1} parent=1 // pred_fallthru
      _
    %355 = vsyncpa [#allocation3], 1
    %356 = vsyncpa [#allocation4], 1

</llo_original>
